<compile_context>
chip_gen: v5e
topology: v5e:2x2
jax: 0.10.0
libtpu: 0.0.40
codegen_flags: <defaults>
</compile_context>

<pallas_src>
import functools

import jax
import jax.numpy as jnp
from jax import lax
from jax.experimental import pallas as pl
from jax.experimental.pallas import tpu as pltpu


_LANE = 128                         # vreg lane width
_ROW_ALIGN = 16                     # sublane-safe row tile alignment (f32 & bf16)
_TMP_ARRAYS = 6                     # budgeted full-width f32 temporaries in-kernel
_VMEM_BUDGET = 32 * 1024 * 1024     # bytes of blocks + temporaries to size tiles by
_VMEM_LIMIT = 48 * 1024 * 1024      # scoped VMEM limit (safe on v5e/v6e/v7x)
_SPLIT_MIN_ROWS = 256               # force >=2 row tiles above this (v7x megacore)


def _round_up(x, m):
    return (x + m - 1) // m * m


def _combined_loss_kernel(logits_ref, tgt_ref, *rest, gamma, n_rows, has_alpha):
    if has_alpha:
        alpha_t_ref, out_ref = rest
    else:
        (out_ref,) = rest

    tn, c = logits_ref.shape
    t = tgt_ref[...]                                           # (T, 1) int32

    # Valid-row mask: the last tile may overhang the unpadded array; overhang
    # rows hold unspecified VMEM data (possibly Inf/NaN) and must be masked.
    row0 = pl.program_id(0) * tn
    rows = lax.broadcasted_iota(jnp.int32, (tn, 1), 0) + row0
    valid = rows < n_rows                                      # (T, 1) bool

    x = logits_ref[...].astype(jnp.float32)                    # (T, C)
    x = jnp.where(valid, x, 0.0)       # clamp garbage rows BEFORE exp/sigmoid

    # one-hot(target) via lane-iota compare (VPU only)
    col = lax.broadcasted_iota(jnp.int32, (tn, c), 1)
    onehot = (col == t).astype(jnp.float32)

    # ---- softmax pieces (single full-width exp pass) ----
    m = jnp.max(x, axis=1, keepdims=True)                      # (T, 1)   XLU
    shifted = x - m
    es = jnp.exp(shifted)                                      # (T, C)   EUP
    sum_es = jnp.sum(es, axis=1, keepdims=True)                # (T, 1)   XLU
    lse = jnp.log(sum_es)                                      # (T, 1)

    shifted_t = jnp.sum(shifted * onehot, axis=1, keepdims=True)   # x_t - m
    es_t = jnp.exp(shifted_t)             # == exp(target shifted logit); per-row EUP

    ce = lse - shifted_t                                       # cross entropy
    pt = es_t / sum_es                                         # == exp(-ce)

    # (1 - pt) ** gamma without float pow when gamma is a small integer
    one_m_pt = 1.0 - pt
    if float(gamma).is_integer() and 0 <= int(gamma) <= 12:
        mod = jnp.ones_like(one_m_pt)
        for _ in range(int(gamma)):
            mod = mod * one_m_pt
    else:
        mod = one_m_pt ** jnp.float32(gamma)
    focal = mod * ce
    if has_alpha:
        # alpha_t = alpha[target] was gathered in the wrapper (no in-kernel reduce)
        focal = alpha_t_ref[...].astype(jnp.float32) * focal

    # ---- IoU pieces ----
    sig = jax.nn.sigmoid(x)                                    # (T, C)   EUP
    sum_sig = jnp.sum(sig, axis=1, keepdims=True)              # (T, 1)   XLU
    inter = jax.nn.sigmoid(shifted_t + m)                      # sigmoid of target logit
    union = sum_sig + 1.0 - inter                              # onehot row-sum == 1
    iou = (inter + 1e-6) / (union + 1e-6)

    # per-tile partial of sum_i (focal_i - iou_i); overhang rows contribute 0
    partial = jnp.sum(jnp.where(valid, focal - iou, 0.0))
    out_ref[...] = jnp.broadcast_to(partial, out_ref.shape).astype(jnp.float32)


def combined_loss(logits, targets, alpha=None, gamma=2):
    """Pallas implementation of CombinedLoss.forward (reduction='mean')."""
    n, c = logits.shape
    has_alpha = alpha is not None
    itemsize = jnp.dtype(logits.dtype).itemsize

    # --- tile sizing against an explicit VMEM byte budget ---
    # VMEM blocks/temporaries are lane-padded to a multiple of 128 regardless of C,
    # and the (tile_n, 1) int32 targets block inflates to 512 B/row per buffer.
    cp_layout = _round_up(c, _LANE)
    bytes_per_row = (
        2 * cp_layout * itemsize                 # logits block, double-buffered
        + 2 * _LANE * 4                          # targets (tile,1) i32, lane-padded, DB
        + (2 * _LANE * 4 if has_alpha else 0)    # alpha_t (tile,1) f32, DB
        + _TMP_ARRAYS * cp_layout * 4)           # in-kernel f32 temporaries
    budget_rows = max(
        _ROW_ALIGN, (_VMEM_BUDGET // bytes_per_row) // _ROW_ALIGN * _ROW_ALIGN)

    if n <= budget_rows:
        if n >= _SPLIT_MIN_ROWS:
            tile_n = _round_up(pl.cdiv(n, 2), _ROW_ALIGN)   # >=2 tiles for 2 TCs
        else:
            tile_n = n                 # single tile; block dim == full array dim
    else:
        tile_n = budget_rows
    num_tiles = pl.cdiv(n, tile_n)

    tgt = targets.astype(jnp.int32).reshape(n, 1)

    operands = [logits, tgt]
    in_specs = [
        pl.BlockSpec((tile_n, c), lambda i: (i, 0)),    # unpadded logits tile
        pl.BlockSpec((tile_n, 1), lambda i: (i, 0)),    # targets tile
    ]
    if has_alpha:
        alpha_t = jnp.asarray(alpha, dtype=jnp.float32)[targets].reshape(n, 1)
        operands.append(alpha_t)
        in_specs.append(pl.BlockSpec((tile_n, 1), lambda i: (i, 0)))

    kernel = functools.partial(
        _combined_loss_kernel, gamma=float(gamma), n_rows=n, has_alpha=has_alpha)

    cost = pl.CostEstimate(
        flops=int(20 * n * c),
        transcendentals=int(2 * n * c + 4 * n),
        bytes_accessed=int(n * c * itemsize + n * 4
                           + (n * 4 if has_alpha else 0)
                           + num_tiles * 8 * 128 * 4),
    )

    partials = pl.pallas_call(
        kernel,
        out_shape=jax.ShapeDtypeStruct((num_tiles * 8, 128), jnp.float32),
        grid=(num_tiles,),
        in_specs=in_specs,
        out_specs=pl.BlockSpec((8, 128), lambda i: (i, 0)),
        compiler_params=pltpu.CompilerParams(
            dimension_semantics=("parallel",),
            vmem_limit_bytes=_VMEM_LIMIT),
        cost_estimate=cost,
    )(*operands)

    total = jnp.sum(partials[0::8, 0])            # one scalar per tile
    return 1.0 + total / jnp.float32(n)


def _reference_combined_loss(logits, targets, alpha=None, gamma=2):
    """Pure-JAX reference mirroring the PyTorch module."""
    x = logits.astype(jnp.float32)
    n, c = x.shape
    logp = jax.nn.log_softmax(x, axis=1)
    onehot = jax.nn.one_hot(targets, c, dtype=jnp.float32)
    ce = -jnp.sum(logp * onehot, axis=1)
    pt = jnp.exp(-ce)
    focal = (1.0 - pt) ** gamma * ce
    if alpha is not None:
        focal = jnp.asarray(alpha)[targets] * focal
    focal_mean = jnp.mean(focal)
    sig = jax.nn.sigmoid(x)
    inter = jnp.sum(sig * onehot, axis=1)
    union = jnp.sum(sig + onehot, axis=1) - inter
    iou = (inter + 1e-6) / (union + 1e-6)
    return focal_mean + (1.0 - jnp.mean(iou))


if __name__ == "__main__":
    key = jax.random.PRNGKey(0)
    k1, k2, k3, k4 = jax.random.split(key, 4)

    # (batch, classes) logits + integer labels, consistent with the module
    N, C = 8, 32
    logits = jax.random.normal(k1, (N, C), dtype=jnp.float32)
    targets = jax.random.randint(k2, (N,), 0, C, dtype=jnp.int32)
    out = jax.block_until_ready(combined_loss(logits, targets))
    ref = _reference_combined_loss(logits, targets)
    assert jnp.allclose(out, ref, rtol=1e-4, atol=1e-4), (out, ref)

    # alpha (class-weight) path: wrapper-side gather feeds the kernel
    alpha = jnp.linspace(0.5, 1.5, C, dtype=jnp.float32)
    out_a = jax.block_until_ready(combined_loss(logits, targets, alpha=alpha))
    ref_a = _reference_combined_loss(logits, targets, alpha=alpha)
    assert jnp.allclose(out_a, ref_a, rtol=1e-4, atol=1e-4), (out_a, ref_a)

    # multi-tile + partial-last-tile masking path (N not a multiple of tile_n)
    N2, C2 = 2500, 32
    logits2 = jax.random.normal(k3, (N2, C2), dtype=jnp.float32)
    targets2 = jax.random.randint(k4, (N2,), 0, C2, dtype=jnp.int32)
    out2 = jax.block_until_ready(combined_loss(logits2, targets2))
    ref2 = _reference_combined_loss(logits2, targets2)
    assert jnp.allclose(out2, ref2, rtol=1e-4, atol=1e-4), (out2, ref2)

    print("KERNEL_OK")
</pallas_src>

<mosaic_0001>
module attributes {stable_mosaic.version = 11 : i64} {
  func.func @_combined_loss_kernel(%arg0: i32, %arg1: memref<8x32xf32, #tpu.memory_space<vmem>>, %arg2: memref<8x1xi32, #tpu.memory_space<vmem>>, %arg3: memref<8x128xf32, #tpu.memory_space<vmem>>) attributes {dimension_semantics = [#tpu.dimension_semantics<parallel>], iteration_bounds = array<i64: 1>, scalar_prefetch = 0 : i64, scratch_operands = 0 : i64, tpu.core_type = #tpu.core_type<tc>, window_params = [{transform_indices = @transform_0, window_bounds = array<i64: 8, 32>}, {transform_indices = @transform_1, window_bounds = array<i64: 8, 1>}, {transform_indices = @transform_2, window_bounds = array<i64: 8, 128>}]} {
    %c0 = arith.constant 0 : index
    %c0_0 = arith.constant 0 : index
    %0 = vector.load %arg2[%c0, %c0_0] : memref<8x1xi32, #tpu.memory_space<vmem>>, vector<8x1xi32>
    %c8_i32 = arith.constant 8 : i32
    %1 = arith.muli %arg0, %c8_i32 : i32
    %2 = tpu.iota {dimensions = array<i32: 0>} : vector<8x1xi32>
    %3 = vector.broadcast %1 : i32 to vector<8x1xi32>
    %4 = arith.addi %2, %3 : vector<8x1xi32>
    %c8_i32_1 = arith.constant 8 : i32
    %5 = vector.broadcast %c8_i32_1 : i32 to vector<8x1xi32>
    %6 = arith.cmpi slt, %4, %5 : vector<8x1xi32>
    %c0_2 = arith.constant 0 : index
    %c0_3 = arith.constant 0 : index
    %7 = vector.load %arg1[%c0_2, %c0_3] : memref<8x32xf32, #tpu.memory_space<vmem>>, vector<8x32xf32>
    %cst = arith.constant 0.000000e+00 : f32
    %8 = vector.shape_cast %6 : vector<8x1xi1> to vector<8x1xi1>
    %9 = vector.broadcast %8 : vector<8x1xi1> to vector<8x32xi1>
    %10 = vector.broadcast %cst : f32 to vector<8x32xf32>
    %11 = arith.select %9, %7, %10 : vector<8x32xi1>, vector<8x32xf32>
    %12 = tpu.iota {dimensions = array<i32: 1>} : vector<8x32xi32>
    %13 = vector.broadcast %0 : vector<8x1xi32> to vector<8x32xi32>
    %14 = arith.cmpi eq, %12, %13 : vector<8x32xi32>
    %15 = arith.extui %14 : vector<8x32xi1> to vector<8x32xi32>
    %16 = arith.sitofp %15 : vector<8x32xi32> to vector<8x32xf32>
    %cst_4 = arith.constant dense<0xFF800000> : vector<8xf32>
    %17 = vector.multi_reduction <maximumf>, %11, %cst_4 [1] : vector<8x32xf32> to vector<8xf32>
    %18 = vector.shape_cast %17 : vector<8xf32> to vector<8x1xf32>
    %19 = vector.broadcast %18 : vector<8x1xf32> to vector<8x32xf32>
    %20 = arith.subf %11, %19 : vector<8x32xf32>
    %21 = math.exp %20 : vector<8x32xf32>
    %cst_5 = arith.constant dense<0.000000e+00> : vector<8xf32>
    %22 = vector.multi_reduction <add>, %21, %cst_5 [1] : vector<8x32xf32> to vector<8xf32>
    %23 = vector.shape_cast %22 : vector<8xf32> to vector<8x1xf32>
    %24 = math.log %23 : vector<8x1xf32>
    %25 = arith.mulf %20, %16 : vector<8x32xf32>
    %cst_6 = arith.constant dense<0.000000e+00> : vector<8xf32>
    %26 = vector.multi_reduction <add>, %25, %cst_6 [1] : vector<8x32xf32> to vector<8xf32>
    %27 = vector.shape_cast %26 : vector<8xf32> to vector<8x1xf32>
    %28 = math.exp %27 : vector<8x1xf32>
    %29 = arith.subf %24, %27 : vector<8x1xf32>
    %30 = arith.divf %28, %23 : vector<8x1xf32>
    %cst_7 = arith.constant 1.000000e+00 : f32
    %31 = vector.broadcast %cst_7 : f32 to vector<8x1xf32>
    %32 = arith.subf %31, %30 : vector<8x1xf32>
    %cst_8 = arith.constant 1.000000e+00 : f32
    %33 = vector.broadcast %cst_8 : f32 to vector<8x1xf32>
    %34 = arith.mulf %33, %32 : vector<8x1xf32>
    %35 = arith.mulf %34, %32 : vector<8x1xf32>
    %36 = arith.mulf %35, %29 : vector<8x1xf32>
    %37 = arith.negf %11 : vector<8x32xf32>
    %38 = math.exp %37 : vector<8x32xf32>
    %cst_9 = arith.constant 1.000000e+00 : f32
    %39 = vector.broadcast %cst_9 : f32 to vector<8x32xf32>
    %40 = arith.addf %39, %38 : vector<8x32xf32>
    %41 = arith.divf %39, %40 : vector<8x32xf32>
    %cst_10 = arith.constant dense<0.000000e+00> : vector<8xf32>
    %42 = vector.multi_reduction <add>, %41, %cst_10 [1] : vector<8x32xf32> to vector<8xf32>
    %43 = vector.shape_cast %42 : vector<8xf32> to vector<8x1xf32>
    %44 = arith.addf %27, %18 : vector<8x1xf32>
    %45 = arith.negf %44 : vector<8x1xf32>
    %46 = math.exp %45 : vector<8x1xf32>
    %cst_11 = arith.constant 1.000000e+00 : f32
    %47 = vector.broadcast %cst_11 : f32 to vector<8x1xf32>
    %48 = arith.addf %47, %46 : vector<8x1xf32>
    %49 = arith.divf %47, %48 : vector<8x1xf32>
    %cst_12 = arith.constant 1.000000e+00 : f32
    %50 = vector.broadcast %cst_12 : f32 to vector<8x1xf32>
    %51 = arith.addf %43, %50 : vector<8x1xf32>
    %52 = arith.subf %51, %49 : vector<8x1xf32>
    %cst_13 = arith.constant 9.99999997E-7 : f32
    %53 = vector.broadcast %cst_13 : f32 to vector<8x1xf32>
    %54 = arith.addf %49, %53 : vector<8x1xf32>
    %cst_14 = arith.constant 9.99999997E-7 : f32
    %55 = vector.broadcast %cst_14 : f32 to vector<8x1xf32>
    %56 = arith.addf %52, %55 : vector<8x1xf32>
    %57 = arith.divf %54, %56 : vector<8x1xf32>
    %58 = arith.subf %36, %57 : vector<8x1xf32>
    %cst_15 = arith.constant 0.000000e+00 : f32
    %59 = vector.broadcast %cst_15 : f32 to vector<8x1xf32>
    %60 = arith.select %6, %58, %59 : vector<8x1xi1>, vector<8x1xf32>
    %61 = vector.shape_cast %60 : vector<8x1xf32> to vector<1x8x1xf32>
    %cst_16 = arith.constant dense<0.000000e+00> : vector<1xf32>
    %62 = vector.multi_reduction <add>, %61, %cst_16 [1, 2] : vector<1x8x1xf32> to vector<1xf32>
    %63 = vector.shape_cast %62 : vector<1xf32> to vector<1x1x1xf32>
    %64 = vector.extract %63[0, 0, 0] : f32 from vector<1x1x1xf32>
    %65 = vector.broadcast %64 : f32 to vector<8x128xf32>
    %c0_17 = arith.constant 0 : index
    %c0_18 = arith.constant 0 : index
    %66 = vector.load %arg3[%c0_17, %c0_18] : memref<8x128xf32, #tpu.memory_space<vmem>>, vector<8x128xf32>
    tpu.vector_store %arg3[%c0_17, %c0_18], %65 {strides = array<i32>} : memref<8x128xf32, #tpu.memory_space<vmem>>, vector<8x128xf32>,
    return
  }
  func.func @transform_0(%arg0: i32) -> (i32, i32) {
    %c0_i32 = arith.constant 0 : i32
    %c0_i32_0 = arith.constant 0 : i32
    return %arg0, %c0_i32 : i32, i32
  }
  func.func @transform_1(%arg0: i32) -> (i32, i32) {
    %c0_i32 = arith.constant 0 : i32
    %c0_i32_0 = arith.constant 0 : i32
    return %arg0, %c0_i32 : i32, i32
  }
  func.func @transform_2(%arg0: i32) -> (i32, i32) {
    %c0_i32 = arith.constant 0 : i32
    %c0_i32_0 = arith.constant 0 : i32
    return %arg0, %c0_i32 : i32, i32
  }
}

</mosaic_0001>

<llo_original>
// kernel: tpu_custom_call.1
$region0: #{tpu_custom_call.1}
  #allocation0 [shape = 'u32[]', space=smem, size = 0x4, offset = 0x4, fixed_abs, tag = 'smem constant byte address 0x4 - core index']
  #allocation1 [shape = 'u32[72,128]{1,0:T(1,128)}', space=vmem, size = 0x9000, scoped, tag = 'internal scratch']
  %s0 = inlined_call_operand.vmem [shape: f32[8,32], index: 0, kind: input, shape index: {}]
  %s1 = inlined_call_operand.vmem [shape: s32[8,1], index: 1, kind: input, shape index: {}]
  %s2 = inlined_call_operand.hbm [shape: f32[8,128], index: 2, kind: output, shape index: {}]
  %s3 = sld [smem:[#allocation0]]
  $region18: #{tpu_custom_call.1} parent=0
    _
  %s5 = ssub.s32 1, %s3
  %s6 = scalar_select 0, %s5, %s3
  $region1: #{tpu_custom_call.1} parent=0
    #allocation2 [shape = 'u8[4096]{0}', space=vmem, size = 0x1000, scoped, tag = 'output window, operand 0, single buffered']
    #allocation3 [shape = 's32[1]{0}', space=sflag, size = 0x4, scoped, tag = 'scoped memory for tpu_custom_call.1']
    %7 = vsyncpa [#allocation3], 0
    // Predicated region
    $region2: #{tpu_custom_call.1} parent=1 // pred_check
      _
    $region3: #{tpu_custom_call.1} parent=1 // pred_check_branch
      %9 = sbr.rel (0) target = $region5
    $region4: #{tpu_custom_call.1} parent=1 // pred_region
      _
    $region5: #{tpu_custom_call.1} parent=1 // pred_fallthru
      _
    // Predicated region
    $region6: #{tpu_custom_call.1} parent=1 // pred_check
      _
    $region7: #{tpu_custom_call.1} parent=1 // pred_check_branch
      %11 = sbr.rel (0) target = $region9
    $region8: #{tpu_custom_call.1} parent=1 // pred_region
      _
    $region9: #{tpu_custom_call.1} parent=1 // pred_fallthru
      _
    %v12 = vld [vmem:[%s1] sm:$0xff]
    %s13 = smul.u32 0, 8
    %v14 = vlaneseq
    %v15 = vshrl.u32 %v14, 7
    %v16 = vstv %s13
    %v17 = vadd.s32 %v15, %v16
    %vm18 = vcmp.lt.s32.totalorder %v17, 8
    %v19 = vld [vmem:[%s0] sm:$0xff]
    %v20 = vsel %vm18, 1, 0
    %vm21 = vcmp.eq.s32.totalorder %v20, 1
    %v22 = vsel %vm21, %v19, 0.0
    %v23 = vlaneseq
    %v24 = vand.u32 %v23, 127
    %25 = vset.pattern.permute.xlu0 0
    %26 = vperm.xlu0 %25, %v12
    %v27 = vpop.permute.xlu0 %26
    %vm28 = vcmp.eq.s32.totalorder %v24, %v27
    %v29 = vsel %vm28, 1, 0
    %v30 = vcvt.s32.f32 %v29
    %vm31 = vcmask 261120
    %v32 = vsel %vm31, %v22, -inf
    %33 = vmax.xlane.f32.xlu0 %v32
    %v34 = vpop.xlane.xlu0 %33
    %v35 = vsub.f32 %v22, %v34
    %v36 = vmul.f32 %v35, 1.442695
    %v37 = vpow.pop %v36
    %v38 = vsel %vm31, %v37, 0.0
    %39 = vadd.xlane.f32.xlu0 %v38
    %v40 = vpop.xlane.xlu0 %39
    %v41 = vlog2.pop %v40
    %v42 = vmul.f32 %v41, 0.6931472
    %v43 = vmul.f32 %v35, %v30
    %v44 = vsel %vm31, %v43, 0.0
    %45 = vadd.xlane.f32.xlu0 %v44
    %v46 = vpop.xlane.xlu0 %45
    %v47 = vmul.f32 %v46, 1.442695
    %v48 = vpow.pop %v47
    %v49 = vsub.f32 %v42, %v46
    %v50 = vrcp.pop %v40
    %v51 = vmul.f32 %v40, %v50
    %v52 = vsub.f32 1.0, %v51
    %v53 = vmul.f32 %v50, %v52
    %v54 = vadd.f32 %v50, %v53
    %vm55 = vweird.f32 %v40
    %vm56 = vweird.f32 %v50
    %vm57 = vmor %vm55, %vm56
    %v58 = vsel %vm57, %v50, %v54
    %v59 = vand.u32 2147483647, %v40
    %vm60 = vcmp.eq.f32.partialorder %v59, 8.507059e+37
    %v61 = vand.u32 %v40, 2147483648
    %v62 = vor.u32 1.1754944e-38, %v61
    %v63 = vsel %vm60, %v62, %v58
    %v64 = vmul.f32 %v48, %v63
    %v65 = vsub.f32 1.0, %v64
    %v66 = vmul.f32 %v65, %v65
    %v67 = vmul.f32 %v66, %v49
    %v68 = vxor.u32 %v22, 2147483648
    %v69 = vmul.f32 %v68, 1.442695
    %v70 = vpow.pop %v69
    %v71 = vadd.f32 %v70, 1.0
    %v72 = vrcp.pop %v71
    %v73 = vmul.f32 %v71, %v72
    %v74 = vsub.f32 1.0, %v73
    %v75 = vmul.f32 %v72, %v74
    %v76 = vadd.f32 %v72, %v75
    %vm77 = vweird.f32 %v71
    %vm78 = vweird.f32 %v72
    %vm79 = vmor %vm77, %vm78
    %v80 = vsel %vm79, %v72, %v76
    %v81 = vand.u32 2147483647, %v71
    %vm82 = vcmp.eq.f32.partialorder %v81, 8.507059e+37
    %v83 = vand.u32 %v71, 2147483648
    %v84 = vor.u32 1.1754944e-38, %v83
    %v85 = vsel %vm82, %v84, %v80
    %v86 = vmul.f32 1.0, %v85
    %v87 = vsel %vm31, %v86, 0.0
    %88 = vadd.xlane.f32.xlu0 %v87
    %v89 = vpop.xlane.xlu0 %88
    %v90 = vadd.f32 %v46, %v34
    %v91 = vxor.u32 %v90, 2147483648
    %v92 = vmul.f32 %v91, 1.442695
    %v93 = vpow.pop %v92
    %v94 = vadd.f32 %v93, 1.0
    %v95 = vrcp.pop %v94
    %v96 = vmul.f32 %v94, %v95
    %v97 = vsub.f32 1.0, %v96
    %v98 = vmul.f32 %v95, %v97
    %v99 = vadd.f32 %v95, %v98
    %vm100 = vweird.f32 %v94
    %vm101 = vweird.f32 %v95
    %vm102 = vmor %vm100, %vm101
    %v103 = vsel %vm102, %v95, %v99
    %v104 = vand.u32 2147483647, %v94
    %vm105 = vcmp.eq.f32.partialorder %v104, 8.507059e+37
    %v106 = vand.u32 %v94, 2147483648
    %v107 = vor.u32 1.1754944e-38, %v106
    %v108 = vsel %vm105, %v107, %v103
    %v109 = vmul.f32 1.0, %v108
    %v110 = vadd.f32 %v89, 1.0
    %v111 = vsub.f32 %v110, %v109
    %v112 = vadd.f32 %v109, 1e-06
    %v113 = vadd.f32 %v111, 1e-06
    %v114 = vrcp.pop %v113
    %v115 = vmul.f32 %v113, %v114
    %v116 = vsub.f32 1.0, %v115
    %v117 = vmul.f32 %v114, %v116
    %v118 = vadd.f32 %v114, %v117
    %vm119 = vweird.f32 %v113
    %vm120 = vweird.f32 %v114
    %vm121 = vmor %vm119, %vm120
    %v122 = vsel %vm121, %v114, %v118
    %v123 = vand.u32 2147483647, %v113
    %vm124 = vcmp.eq.f32.partialorder %v123, 8.507059e+37
    %v125 = vand.u32 %v113, 2147483648
    %v126 = vor.u32 1.1754944e-38, %v125
    %v127 = vsel %vm124, %v126, %v122
    %v128 = vmul.f32 %v112, %v127
    %v129 = vsub.f32 %v67, %v128
    %v130 = vsel %vm18, %v129, 0.0
    %vm131 = vcmask 7168
    %v132 = vsel %vm131, %v130, 0.0
    %133 = vadd.xlane.f32.xlu0 %v132
    %v134 = vpop.xlane.xlu0 %133
    %v135 = vrot.slane %v134, 4
    %v136 = vadd.f32 %v134, %v135
    %v137 = vrot.slane %v136, 2
    %v138 = vadd.f32 %v136, %v137
    %v139 = vrot.slane %v138, 1
    %v140 = vadd.f32 %v138, %v139
    %s141 = vtos %v140
    %v142 = vstv %s141
    %143 = vst [vmem:[#allocation2] sm:$0xff] %v142
    // Predicated region
    $region10: #{tpu_custom_call.1} parent=1 // pred_check
      _
    $region11: #{tpu_custom_call.1} parent=1 // pred_check_branch
      %145 = sbr.rel (0) target = $region13
    $region12: #{tpu_custom_call.1} parent=1 // pred_region
      %147 = vsyncadd [#allocation3], 0
      %s149 = sshll.u32 [#allocation2], 4
      %s150 = int_to_ptr.vmem [resolvable:$true] %s149
      %s151 = sshll.u32 %s2, 4
      %s152 = int_to_ptr.hbm [resolvable:$true] %s151
      %154 = dma.vmem_to_hbm [thread:$0]  %s150, 128, %s152, [#allocation3]
    $region13: #{tpu_custom_call.1} parent=1 // pred_fallthru
      _
    // Predicated region
    $region14: #{tpu_custom_call.1} parent=1 // pred_check
      _
    $region15: #{tpu_custom_call.1} parent=1 // pred_check_branch
      %156 = sbr.rel (0) target = $region17
    $region16: #{tpu_custom_call.1} parent=1 // pred_region
      %158 = dma.done [#allocation3], 128
    $region17: #{tpu_custom_call.1} parent=1 // pred_fallthru
      _
    %159 = vsyncpa [#allocation3], 1

</llo_original>
